<compile_context>
chip_gen: v5e
topology: v5e:2x2
jax: 0.10.0
libtpu: 0.0.40
codegen_flags: <defaults>
</compile_context>

<pallas_src>
import functools

import jax
import jax.numpy as jnp
from jax import lax
from jax.experimental import pallas as pl
from jax.experimental.pallas import tpu as pltpu

_LANE = 128
_SUB = 8
_MAX_ROWS = 4096   # rows per block: (4096, 128) f32 = 2 MiB per input per buffer
_SUB_ROWS = 256    # rows per inner fori_loop sub-slice (keeps vreg live ranges tight)


def _stable_bce(x, t):
    # -[t*log(sigmoid(x)) + (1-t)*log(1-sigmoid(x))] == softplus(x) - t*x
    return jnp.maximum(x, 0.0) - x * t + jnp.log1p(jnp.exp(-jnp.abs(x)))


def _bce_sum_kernel(x_ref, t_ref, o_ref, *, rows_per_block, sub_rows,
                    blocks_per_chunk, n_blocks, last_block_rows, need_mask):
    """Accumulate the stable-BCE sum of this block into the resident o_ref.

    o_ref: (8, 128) f32 block, resident across the inner ("arbitrary") grid
    axis; one independent accumulator block per outer ("parallel") chunk.
    """
    c = pl.program_id(0)   # parallel chunk (megacore / dual-TC)
    i = pl.program_id(1)   # reduction step within the chunk

    @pl.when(i == 0)
    def _():
        o_ref[...] = jnp.zeros_like(o_ref)

    def fold(v):
        # (nrows, 128) -> (8, 128): pure full-vreg VALU adds, no per-step XLU.
        return jnp.sum(v.reshape(-1, _SUB, _LANE), axis=0)

    def subslice_sum(r0, nrows, limit_rows):
        x = x_ref[pl.ds(r0, nrows), :].astype(jnp.float32)
        t = t_ref[pl.ds(r0, nrows), :].astype(jnp.float32)
        bce = _stable_bce(x, t)
        if limit_rows is not None:
            # Row-granular mask against a per-block scalar (no global element
            # index -> no int32-overflow path).  Garbage in invalid rows
            # (partial-boundary / overhang DMA) is select-replaced by 0.
            row = lax.broadcasted_iota(jnp.int32, (nrows, _LANE), 0)
            bce = jnp.where(row < (limit_rows - r0), bce, 0.0)
        return fold(bce)

    n_full_sub = rows_per_block // sub_rows            # static
    rem_rows = rows_per_block - n_full_sub * sub_rows  # static, multiple of 8

    def block_sum(limit_rows):
        acc = jnp.zeros((_SUB, _LANE), jnp.float32)
        if n_full_sub > 0:
            def body(j, a):
                r0 = pl.multiple_of(j * sub_rows, sub_rows)
                return a + subslice_sum(r0, sub_rows, limit_rows)
            acc = lax.fori_loop(0, n_full_sub, body, acc)
        if rem_rows > 0:
            acc = acc + subslice_sum(n_full_sub * sub_rows, rem_rows, limit_rows)
        return acc

    if not need_mask:
        # Common aligned case: no mask codegen at all.
        o_ref[...] += block_sum(None)
    else:
        blk = c * blocks_per_chunk + i   # logical block index (may overhang)
        valid_rows = jnp.where(
            blk < n_blocks - 1, rows_per_block,
            jnp.where(blk == n_blocks - 1, last_block_rows, 0),
        ).astype(jnp.int32)

        @pl.when(valid_rows == rows_per_block)   # interior blocks: unmasked fast path
        def _():
            o_ref[...] += block_sum(None)

        @pl.when(valid_rows < rows_per_block)    # partial last block / overhang (adds 0)
        def _():
            o_ref[...] += block_sum(valid_rows)


def focal_loss(inputs, targets, smooth=1, *, alpha=0.8, gamma=2):
    """JAX/Pallas equivalent of FocalLoss.forward(inputs, targets, smooth).

    `inputs` are raw logits (sigmoid applied inside, like the PyTorch module).
    `smooth` is accepted and ignored, exactly as in the PyTorch forward.
    Narrow dtypes (bf16 logits, bf16/int masks) are streamed as-is and
    upcast to f32 inside the kernel.
    """
    del smooth  # unused by the PyTorch module as well
    x = inputs.reshape(-1)
    t = targets.reshape(-1)
    n = int(x.shape[0])

    align = _SUB * _LANE                    # 1024 elements = 8 rows of 128 lanes
    n_main = (n // align) * align           # kernel consumes the aligned prefix
    total = jnp.zeros((), jnp.float32)

    if n_main > 0:
        rows = n_main // _LANE              # multiple of 8
        rows_per_block = min(_MAX_ROWS, rows)
        n_blocks = pl.cdiv(rows, rows_per_block)
        last_block_rows = rows - (n_blocks - 1) * rows_per_block
        num_chunks = 2 if n_blocks >= 2 else 1            # both v7x TCs when possible
        blocks_per_chunk = pl.cdiv(n_blocks, num_chunks)
        overhang = num_chunks * blocks_per_chunk != n_blocks
        need_mask = overhang or (last_block_rows != rows_per_block)
        sub_rows = min(_SUB_ROWS, rows_per_block)

        # No full-array jnp.pad: only a prefix slice when the size is ragged.
        x_main = x if n_main == n else x[:n_main]
        t_main = t if n_main == n else t[:n_main]
        x2 = x_main.reshape(rows, _LANE)
        t2 = t_main.reshape(rows, _LANE)

        def in_index_map(c, i):
            blk = c * blocks_per_chunk + i
            if overhang:
                # Keep the DMA window in bounds; the overhanging logical block
                # is zero-masked inside the kernel.
                blk = jnp.minimum(blk, n_blocks - 1)
            return (blk, 0)

        in_spec = pl.BlockSpec((rows_per_block, _LANE), in_index_map)

        kernel = functools.partial(
            _bce_sum_kernel,
            rows_per_block=rows_per_block,
            sub_rows=sub_rows,
            blocks_per_chunk=blocks_per_chunk,
            n_blocks=n_blocks,
            last_block_rows=last_block_rows,
            need_mask=need_mask,
        )

        partials = pl.pallas_call(
            kernel,
            out_shape=jax.ShapeDtypeStruct((num_chunks, _SUB, _LANE), jnp.float32),
            grid_spec=pltpu.PrefetchScalarGridSpec(
                num_scalar_prefetch=0,
                grid=(num_chunks, blocks_per_chunk),
                in_specs=[in_spec, in_spec],
                out_specs=pl.BlockSpec((None, _SUB, _LANE), lambda c, i: (c, 0, 0)),
            ),
            compiler_params=pltpu.CompilerParams(
                dimension_semantics=("parallel", "arbitrary"),
            ),
        )(x2, t2)
        total = total + jnp.sum(partials)

    if n_main < n:
        # Ragged tail (< 1024 elements): plain-JAX epilogue, negligible cost.
        xt = x[n_main:].astype(jnp.float32)
        tt = t[n_main:].astype(jnp.float32)
        total = total + jnp.sum(_stable_bce(xt, tt))

    # Scalar focal epilogue (a handful of ops) in plain JAX.
    bce_mean = total / jnp.float32(n)
    bce_exp = jnp.exp(-bce_mean)
    return alpha * (1.0 - bce_exp) ** gamma * bce_mean


def focal_loss_ref(inputs, targets, smooth=1, *, alpha=0.8, gamma=2):
    """Pure-JAX reference mirroring the PyTorch FocalLoss.forward."""
    del smooth
    p = jax.nn.sigmoid(inputs.reshape(-1).astype(jnp.float32))
    t = targets.reshape(-1).astype(jnp.float32)
    bce = -jnp.mean(t * jnp.log(p) + (1.0 - t) * jnp.log1p(-p))
    bce_exp = jnp.exp(-bce)
    return alpha * (1.0 - bce_exp) ** gamma * bce


if __name__ == "__main__":
    key = jax.random.PRNGKey(0)
    shapes = [
        (2, 4, 16, 16),    # tiny aligned case: single small block, no mask
        (1, 3, 50, 50),    # ragged size: aligned prefix in kernel + JAX tail
        (2, 4, 256, 256),  # exactly one full (4096, 128) block
        (2, 4, 320, 320),  # 2 blocks -> 2 parallel chunks, partial last block (masked)
        (1, 3, 700, 700),  # 3 blocks -> 2 chunks w/ overhang + partial block + ragged tail
    ]
    for shape in shapes:
        key, k1, k2 = jax.random.split(key, 3)
        logits = jax.random.normal(k1, shape, dtype=jnp.float32)
        masks = (jax.random.uniform(k2, shape) > 0.5).astype(jnp.float32)

        out = jax.block_until_ready(focal_loss(logits, masks, smooth=1))
        ref = jax.block_until_ready(focal_loss_ref(logits, masks, smooth=1))
        assert jnp.allclose(out, ref, atol=1e-5, rtol=1e-4), (shape, out, ref)

    # bf16 logits streamed unconverted (kernel upcasts per sub-slice).
    key, k1, k2 = jax.random.split(key, 3)
    shape = (2, 4, 256, 256)
    logits_bf16 = jax.random.normal(k1, shape, dtype=jnp.float32).astype(jnp.bfloat16)
    masks = (jax.random.uniform(k2, shape) > 0.5).astype(jnp.float32)
    out = jax.block_until_ready(focal_loss(logits_bf16, masks, smooth=1))
    ref = jax.block_until_ready(
        focal_loss_ref(logits_bf16.astype(jnp.float32), masks, smooth=1))
    assert jnp.allclose(out, ref, atol=1e-5, rtol=1e-4), (shape, out, ref)

    print("KERNEL_OK")
</pallas_src>

<mosaic_0001>
module attributes {stable_mosaic.version = 11 : i64} {
  func.func @_bce_sum_kernel(%arg0: i32, %arg1: i32, %arg2: memref<16x128xf32, #tpu.memory_space<vmem>>, %arg3: memref<16x128xf32, #tpu.memory_space<vmem>>, %arg4: memref<1x8x128xf32, #tpu.memory_space<vmem>>) attributes {dimension_semantics = [#tpu.dimension_semantics<parallel>, #tpu.dimension_semantics<arbitrary>], iteration_bounds = array<i64: 1, 1>, scalar_prefetch = 0 : i64, scratch_operands = 0 : i64, tpu.core_type = #tpu.core_type<tc>, window_params = [{transform_indices = @transform_0, window_bounds = array<i64: 16, 128>}, {transform_indices = @transform_1, window_bounds = array<i64: 16, 128>}, {transform_indices = @transform_2, window_bounds = array<i64: 1, 8, 128>}]} {
    %c0_i32 = arith.constant 0 : i32
    %0 = arith.cmpi eq, %arg1, %c0_i32 : i32
    %1 = arith.extui %0 : i1 to i32
    %c0_i32_0 = arith.constant 0 : i32
    %2 = arith.cmpi ne, %1, %c0_i32_0 : i32
    scf.if %2 {
      %cst_12 = arith.constant 0.000000e+00 : f32
      %29 = vector.broadcast %cst_12 : f32 to vector<8x128xf32>
      %c0_13 = arith.constant 0 : index
      %c0_14 = arith.constant 0 : index
      %c0_15 = arith.constant 0 : index
      %30 = vector.load %arg4[%c0_13, %c0_14, %c0_15] : memref<1x8x128xf32, #tpu.memory_space<vmem>>, vector<1x8x128xf32>
      %31 = vector.shape_cast %30 : vector<1x8x128xf32> to vector<8x128xf32>
      %32 = vector.shape_cast %29 : vector<8x128xf32> to vector<1x8x128xf32>
      tpu.vector_store %arg4[%c0_13, %c0_14, %c0_15], %32 {strides = array<i32>} : memref<1x8x128xf32, #tpu.memory_space<vmem>>, vector<1x8x128xf32>,
    } else {
    }
    %c0 = arith.constant 0 : index
    %c0_1 = arith.constant 0 : index
    %c0_2 = arith.constant 0 : index
    %3 = vector.load %arg4[%c0, %c0_1, %c0_2] : memref<1x8x128xf32, #tpu.memory_space<vmem>>, vector<1x8x128xf32>
    %4 = vector.shape_cast %3 : vector<1x8x128xf32> to vector<8x128xf32>
    %cst = arith.constant 0.000000e+00 : f32
    %5 = vector.broadcast %cst : f32 to vector<8x128xf32>
    %c0_i32_3 = arith.constant 0 : i32
    %c16_i32 = arith.constant 16 : i32
    %6 = arith.muli %c0_i32_3, %c16_i32 : i32
    %7 = tpu.assume_multiple %6, 16 : i32
    %8 = arith.index_cast %7 : i32 to index
    %c0_4 = arith.constant 0 : index
    %9 = vector.load %arg2[%8, %c0_4] : memref<16x128xf32, #tpu.memory_space<vmem>>, vector<16x128xf32>
    %10 = arith.index_cast %7 : i32 to index
    %c0_5 = arith.constant 0 : index
    %11 = vector.load %arg3[%10, %c0_5] : memref<16x128xf32, #tpu.memory_space<vmem>>, vector<16x128xf32>
    %cst_6 = arith.constant 0.000000e+00 : f32
    %12 = vector.broadcast %cst_6 : f32 to vector<16x128xf32>
    %13 = arith.maximumf %9, %12 : vector<16x128xf32>
    %14 = arith.mulf %9, %11 : vector<16x128xf32>
    %15 = arith.subf %13, %14 : vector<16x128xf32>
    %16 = math.absf %9 : vector<16x128xf32>
    %cst_7 = arith.constant 0.000000e+00 : f32
    %17 = vector.broadcast %cst_7 : f32 to vector<16x128xf32>
    %18 = arith.subf %17, %16 : vector<16x128xf32>
    %19 = math.exp %18 : vector<16x128xf32>
    %20 = math.log1p %19 : vector<16x128xf32>
    %21 = arith.addf %15, %20 : vector<16x128xf32>
    %22 = vector.shape_cast %21 : vector<16x128xf32> to vector<2x8x128xf32>
    %cst_8 = arith.constant dense<0.000000e+00> : vector<8x128xf32>
    %23 = vector.multi_reduction <add>, %22, %cst_8 [0] : vector<2x8x128xf32> to vector<8x128xf32>
    %24 = arith.addf %5, %23 : vector<8x128xf32>
    %c1_i32 = arith.constant 1 : i32
    %25 = arith.addf %4, %24 : vector<8x128xf32>
    %c0_9 = arith.constant 0 : index
    %c0_10 = arith.constant 0 : index
    %c0_11 = arith.constant 0 : index
    %26 = vector.load %arg4[%c0_9, %c0_10, %c0_11] : memref<1x8x128xf32, #tpu.memory_space<vmem>>, vector<1x8x128xf32>
    %27 = vector.shape_cast %26 : vector<1x8x128xf32> to vector<8x128xf32>
    %28 = vector.shape_cast %25 : vector<8x128xf32> to vector<1x8x128xf32>
    tpu.vector_store %arg4[%c0_9, %c0_10, %c0_11], %28 {strides = array<i32>} : memref<1x8x128xf32, #tpu.memory_space<vmem>>, vector<1x8x128xf32>,
    return
  }
  func.func @transform_0(%arg0: i32, %arg1: i32) -> (i32, i32) {
    %c1_i32 = arith.constant 1 : i32
    %0 = arith.muli %arg0, %c1_i32 : i32
    %1 = arith.addi %0, %arg1 : i32
    %c0_i32 = arith.constant 0 : i32
    %c0_i32_0 = arith.constant 0 : i32
    return %1, %c0_i32 : i32, i32
  }
  func.func @transform_1(%arg0: i32, %arg1: i32) -> (i32, i32) {
    %c1_i32 = arith.constant 1 : i32
    %0 = arith.muli %arg0, %c1_i32 : i32
    %1 = arith.addi %0, %arg1 : i32
    %c0_i32 = arith.constant 0 : i32
    %c0_i32_0 = arith.constant 0 : i32
    return %1, %c0_i32 : i32, i32
  }
  func.func @transform_2(%arg0: i32, %arg1: i32) -> (i32, i32, i32) {
    %c0_i32 = arith.constant 0 : i32
    %c0_i32_0 = arith.constant 0 : i32
    %c0_i32_1 = arith.constant 0 : i32
    return %arg0, %c0_i32, %c0_i32_0 : i32, i32, i32
  }
}

</mosaic_0001>

<llo_original>
// kernel: tpu_custom_call.1
$region0: #{tpu_custom_call.1}
  #allocation0 [shape = 'u32[]', space=smem, size = 0x4, offset = 0x4, fixed_abs, tag = 'smem constant byte address 0x4 - core index']
  #allocation1 [shape = 'u32[72,128]{1,0:T(1,128)}', space=vmem, size = 0x9000, scoped, tag = 'internal scratch']
  %s0 = inlined_call_operand.hbm [shape: f32[16,128], index: 0, kind: input, shape index: {}]
  %s1 = inlined_call_operand.hbm [shape: f32[16,128], index: 1, kind: input, shape index: {}]
  %s2 = inlined_call_operand.hbm [shape: f32[1,8,128], index: 2, kind: output, shape index: {}]
  %s3 = sld [smem:[#allocation0]]
  $region30: #{tpu_custom_call.1} parent=0
    _
  %s5 = ssub.s32 1, %s3
  %s6 = scalar_select 0, %s5, %s3
  $region1: #{tpu_custom_call.1} parent=0
    #allocation2 [shape = 'u8[8192]{0}', space=vmem, size = 0x2000, scoped, tag = 'input window, operand 0, single buffered']
    #allocation3 [shape = 's32[1]{0}', space=sflag, size = 0x4, scoped, tag = 'scoped memory for tpu_custom_call.1']
    #allocation4 [shape = 's32[1]{0}', space=sflag, size = 0x4, scoped, tag = 'scoped memory for tpu_custom_call.1']
    #allocation5 [shape = 'u8[8192]{0}', space=vmem, size = 0x2000, scoped, tag = 'input window, operand 1, single buffered']
    #allocation6 [shape = 's32[1]{0}', space=sflag, size = 0x4, scoped, tag = 'scoped memory for tpu_custom_call.1']
    #allocation7 [shape = 'u8[4096]{0}', space=vmem, size = 0x1000, scoped, tag = 'output window, operand 0, single buffered']
    %7 = vsyncpa [#allocation3], 0
    %8 = vsyncpa [#allocation6], 0
    %9 = vsyncpa [#allocation4], 0
    // Predicated region
    $region2: #{tpu_custom_call.1} parent=1 // pred_check
      _
    $region3: #{tpu_custom_call.1} parent=1 // pred_check_branch
      %11 = sbr.rel (0) target = $region5
    $region4: #{tpu_custom_call.1} parent=1 // pred_region
      %s12 = sadd.s32 0, 0
      %s13 = smul.u32 2, %s12
      %15 = vsyncadd [#allocation3], 0
      %s16 = smul.addr %s13, 8
      %s17 = scalar_lea.hbm %s0, %s16
      %s18 = sshll.u32 %s17, 4
      %s19 = int_to_ptr.hbm [resolvable:$true] %s18
      %s20 = sshll.u32 [#allocation2], 4
      %s21 = int_to_ptr.vmem [resolvable:$true] %s20
      %26 = dma.hbm_to_vmem [thread:$0]  %s19, 256, %s21, [#allocation3], 128, 128, 8
    $region5: #{tpu_custom_call.1} parent=1 // pred_fallthru
      _
    // Predicated region
    $region6: #{tpu_custom_call.1} parent=1 // pred_check
      _
    $region7: #{tpu_custom_call.1} parent=1 // pred_check_branch
      %28 = sbr.rel (0) target = $region9
    $region8: #{tpu_custom_call.1} parent=1 // pred_region
      %s29 = sadd.s32 0, 0
      %s30 = smul.u32 2, %s29
      %32 = vsyncadd [#allocation6], 0
      %s33 = smul.addr %s30, 8
      %s34 = scalar_lea.hbm %s1, %s33
      %s35 = sshll.u32 %s34, 4
      %s36 = int_to_ptr.hbm [resolvable:$true] %s35
      %s37 = sshll.u32 [#allocation5], 4
      %s38 = int_to_ptr.vmem [resolvable:$true] %s37
      %43 = dma.hbm_to_vmem [thread:$0]  %s36, 256, %s38, [#allocation6], 128, 128, 8
    $region9: #{tpu_custom_call.1} parent=1 // pred_fallthru
      _
    // Predicated region
    $region10: #{tpu_custom_call.1} parent=1 // pred_check
      _
    $region11: #{tpu_custom_call.1} parent=1 // pred_check_branch
      %45 = sbr.rel (0) target = $region13
    $region12: #{tpu_custom_call.1} parent=1 // pred_region
      %47 = dma.done [#allocation3], 256
    $region13: #{tpu_custom_call.1} parent=1 // pred_fallthru
      _
    // Predicated region
    $region14: #{tpu_custom_call.1} parent=1 // pred_check
      _
    $region15: #{tpu_custom_call.1} parent=1 // pred_check_branch
      %49 = sbr.rel (0) target = $region17
    $region16: #{tpu_custom_call.1} parent=1 // pred_region
      %51 = dma.done [#allocation6], 256
    $region17: #{tpu_custom_call.1} parent=1 // pred_fallthru
      _
    %s52 = sadd.s32 0, 0
    %s53 = smul.u32 2, %s52
    %s54 = sadd.s32 0, 0
    %s55 = smul.u32 2, %s54
    %p56 = scmp.eq.s32.totalorder 0, 0
    // Predicated region
    $region18: #{tpu_custom_call.1} parent=1 // pred_check
      %p57 = pneg %p56
    $region19: #{tpu_custom_call.1} parent=1 // pred_check_branch
      %59 = sbr.rel (%p57) target = $region21
    $region20: #{tpu_custom_call.1} parent=1 // pred_region
      %60 = vst [vmem:[#allocation7] sm:$0xff] 0.0
    $region21: #{tpu_custom_call.1} parent=1 // pred_fallthru
      _
    %v61 = vld [vmem:[#allocation7] sm:$0xff]
    %v62 = vld [vmem:[#allocation2] sm:$0xff]
    %v63 = vld [vmem:[#allocation2 + $0x8] sm:$0xff]
    %v64 = vld [vmem:[#allocation5] sm:$0xff]
    %v65 = vld [vmem:[#allocation5 + $0x8] sm:$0xff]
    %v66 = vmax.f32 %v62, 0.0
    %v67 = vmax.f32 %v63, 0.0
    %v68 = vmul.f32 %v62, %v64
    %v69 = vmul.f32 %v63, %v65
    %v70 = vsub.f32 %v66, %v68
    %v71 = vsub.f32 %v67, %v69
    %v72 = vand.u32 2147483647, %v62
    %v73 = vand.u32 2147483647, %v63
    %v74 = vsub.f32 0.0, %v72
    %v75 = vsub.f32 0.0, %v73
    %v76 = vmul.f32 %v74, 1.442695
    %v77 = vpow.pop %v76
    %v78 = vmul.f32 %v75, 1.442695
    %v79 = vpow.pop %v78
    %v80 = vadd.f32 %v77, 1.0
    %v81 = vlog2.pop %v80
    %v82 = vmul.f32 %v81, 0.6931472
    %v83 = vmul.f32 -0.5, %v77
    %v84 = vadd.f32 %v83, 1.0
    %v85 = vmul.f32 %v84, %v77
    %v86 = vand.u32 2147483647, %v77
    %vm87 = vcmp.lt.f32.partialorder %v86, 0.0004427343
    %v88 = vsel %vm87, %v85, %v82
    %v89 = vadd.f32 %v79, 1.0
    %v90 = vlog2.pop %v89
    %v91 = vmul.f32 %v90, 0.6931472
    %v92 = vmul.f32 -0.5, %v79
    %v93 = vadd.f32 %v92, 1.0
    %v94 = vmul.f32 %v93, %v79
    %v95 = vand.u32 2147483647, %v79
    %vm96 = vcmp.lt.f32.partialorder %v95, 0.0004427343
    %v97 = vsel %vm96, %v94, %v91
    %v98 = vadd.f32 %v70, %v88
    %v99 = vadd.f32 %v71, %v97
    %v100 = vadd.f32 %v98, %v99
    %v101 = vadd.f32 %v100, 0.0
    %v102 = vadd.f32 %v61, %v101
    %103 = vst [vmem:[#allocation7] sm:$0xff] %v102
    // Predicated region
    $region22: #{tpu_custom_call.1} parent=1 // pred_check
      _
    $region23: #{tpu_custom_call.1} parent=1 // pred_check_branch
      %105 = sbr.rel (0) target = $region25
    $region24: #{tpu_custom_call.1} parent=1 // pred_region
      %107 = vsyncadd [#allocation4], 0
      %s109 = sshll.u32 [#allocation7], 4
      %s110 = int_to_ptr.vmem [resolvable:$true] %s109
      %s111 = sshll.u32 %s2, 4
      %s112 = int_to_ptr.hbm [resolvable:$true] %s111
      %114 = dma.vmem_to_hbm [thread:$0]  %s110, 128, %s112, [#allocation4]
    $region25: #{tpu_custom_call.1} parent=1 // pred_fallthru
      _
    // Predicated region
    $region26: #{tpu_custom_call.1} parent=1 // pred_check
      _
    $region27: #{tpu_custom_call.1} parent=1 // pred_check_branch
      %116 = sbr.rel (0) target = $region29
    $region28: #{tpu_custom_call.1} parent=1 // pred_region
      %118 = dma.done [#allocation4], 128
    $region29: #{tpu_custom_call.1} parent=1 // pred_fallthru
      _
    %119 = vsyncpa [#allocation3], 1
    %120 = vsyncpa [#allocation6], 1
    %121 = vsyncpa [#allocation4], 1

</llo_original>
